<compile_context>
chip_gen: v6e
topology: v6e:2x2x1
jax: 0.10.0
libtpu: 0.0.40
codegen_flags: <defaults>
</compile_context>

<pallas_src>
import jax
import jax.numpy as jnp
from jax.experimental import pallas as pl
from jax.experimental.pallas import tpu as pltpu


def _copy_kernel(x_ref, o_ref):
    # Pure streaming copy of the current VMEM tile.
    o_ref[...] = x_ref[...]


_LANE = 128
_WIDTH = 8 * _LANE                  # 1024-wide lane-dense last dim (unmasked full vst)
_TILE_BYTES = 4 * 1024 * 1024       # ~4 MiB per tile (good v6e/v7x amortization)
_SINGLE_BLOCK_BYTES = 4 * 1024 * 1024
_VMEM_LIMIT_BYTES = 32 * 1024 * 1024  # covers 3 in + 2 out buffers of 4 MiB with headroom


def _stream_copy(x2, tile_rows, grid_rows, deep_buffer):
    rows, width = x2.shape
    if deep_buffer:
        in_spec = pl.BlockSpec((tile_rows, width), lambda i: (i, 0),
                               pipeline_mode=pl.Buffered(3))
    else:
        in_spec = pl.BlockSpec((tile_rows, width), lambda i: (i, 0))
    return pl.pallas_call(
        _copy_kernel,
        out_shape=jax.ShapeDtypeStruct((rows, width), x2.dtype),
        grid=(grid_rows,),
        in_specs=[in_spec],
        out_specs=pl.BlockSpec((tile_rows, width), lambda i: (i, 0)),
        compiler_params=pltpu.CompilerParams(
            # Tiles are independent -> megacore sharding on v7x; harmless on v5e/v6e.
            dimension_semantics=("parallel",),
            vmem_limit_bytes=_VMEM_LIMIT_BYTES,
        ),
        # Identity writes the same bytes: let XLA reuse the input buffer in place.
        input_output_aliases={0: 0},
    )(x2)


def identity(x):
    """Pallas identity: y = x, same shape & dtype."""
    # TODO(synk): a production Identity needs no kernel at all — `return x` is zero HBM
    # traffic; the Pallas copy below exists only to exercise a real kernel path.
    total = int(x.size)
    if total == 0:
        return x

    itemsize = jnp.dtype(x.dtype).itemsize
    sub = max(1, 32 // itemsize)      # sublane multiple per dtype: f32->8, bf16->16, i8->32

    # ---- choose a lane-dense width WITHOUT any pad/slice copies -----------------
    if total % _WIDTH == 0:
        width = _WIDTH
    elif total % _LANE == 0:
        width = _LANE
    elif total * itemsize <= _SINGLE_BLOCK_BYTES:
        # Small misaligned tensors: one full-extent block (always legal), no padding.
        out = pl.pallas_call(
            _copy_kernel,
            out_shape=jax.ShapeDtypeStruct(x.shape, x.dtype),
            compiler_params=pltpu.CompilerParams(vmem_limit_bytes=_VMEM_LIMIT_BYTES),
            input_output_aliases={0: 0},
        )(x)
        return out
    else:
        # Large misaligned tensors: padding + re-slicing would double HBM traffic,
        # so Identity just hands the buffer back untouched.
        return x

    rows = total // width
    x2 = x.reshape(rows, width)       # row-major reshape: no relayout copy

    # ---- row tiling: ~4 MiB tiles, grid >= 2 when possible (v7x 2-TC sharding) --
    max_tile_rows = max(sub, (_TILE_BYTES // (width * itemsize)) // sub * sub)
    if rows <= max_tile_rows:
        if rows >= 2 * sub:
            # Split mid-size arrays into two tiles so both v7x TensorCores get work.
            tile_rows = ((pl.cdiv(rows, 2) + sub - 1) // sub) * sub
        else:
            tile_rows = rows          # single full-extent block (always legal)
    else:
        tile_rows = max_tile_rows
    grid_rows = pl.cdiv(rows, tile_rows)

    out = _stream_copy(x2, tile_rows, grid_rows, deep_buffer=(grid_rows >= 3))
    return out.reshape(x.shape)


if __name__ == "__main__":
    key = jax.random.PRNGKey(0)

    # Primary shape implied by the module's typical NCHW use.
    x = jax.random.normal(key, (2, 4, 16, 16), dtype=jnp.float32)
    y = identity(x)
    jax.block_until_ready(y)
    assert y.shape == x.shape, f"shape mismatch: {y.shape} vs {x.shape}"
    assert y.dtype == x.dtype, f"dtype mismatch: {y.dtype} vs {x.dtype}"
    assert bool(jnp.array_equal(y, x)), "identity output differs from input"

    # Multi-tile streaming path (grid == 2 -> both v7x TensorCores active).
    x_big = jax.random.normal(jax.random.PRNGKey(0), (8, 16, 64, 128), dtype=jnp.float32)
    y_big = identity(x_big)
    jax.block_until_ready(y_big)
    assert bool(jnp.array_equal(y_big, x_big)), "identity (2-tile path) differs from input"

    # Longer grid: 4 MiB tiles + Buffered(3) input pipelining.
    x_huge = jax.random.normal(jax.random.PRNGKey(0), (16, 16, 128, 128), dtype=jnp.float32)
    y_huge = identity(x_huge)
    jax.block_until_ready(y_huge)
    assert bool(jnp.array_equal(y_huge, x_huge)), "identity (deep-buffer path) differs from input"

    # Misaligned small tensor: single full-extent block, no pad/slice copies.
    x_odd = jax.random.normal(jax.random.PRNGKey(0), (3, 5, 7, 11), dtype=jnp.float32)
    y_odd = identity(x_odd)
    jax.block_until_ready(y_odd)
    assert bool(jnp.array_equal(y_odd, x_odd)), "identity (misaligned path) differs from input"

    print("KERNEL_OK")
</pallas_src>

<mosaic_0001>
module attributes {stable_mosaic.version = 11 : i64} {
  func.func @_copy_kernel(%arg0: i32, %arg1: memref<2x1024xf32, #tpu.memory_space<vmem>>, %arg2: memref<2x1024xf32, #tpu.memory_space<vmem>>) attributes {dimension_semantics = [#tpu.dimension_semantics<parallel>], iteration_bounds = array<i64: 1>, scalar_prefetch = 0 : i64, scratch_operands = 0 : i64, tpu.core_type = #tpu.core_type<tc>, window_params = [{transform_indices = @transform_0, window_bounds = array<i64: 2, 1024>}, {transform_indices = @transform_1, window_bounds = array<i64: 2, 1024>}]} {
    %c0 = arith.constant 0 : index
    %c0_0 = arith.constant 0 : index
    %0 = vector.load %arg1[%c0, %c0_0] : memref<2x1024xf32, #tpu.memory_space<vmem>>, vector<2x1024xf32>
    %c0_1 = arith.constant 0 : index
    %c0_2 = arith.constant 0 : index
    %1 = vector.load %arg2[%c0_1, %c0_2] : memref<2x1024xf32, #tpu.memory_space<vmem>>, vector<2x1024xf32>
    tpu.vector_store %arg2[%c0_1, %c0_2], %0 {strides = array<i32>} : memref<2x1024xf32, #tpu.memory_space<vmem>>, vector<2x1024xf32>,
    return
  }
  func.func @transform_0(%arg0: i32) -> (i32, i32) {
    %c0_i32 = arith.constant 0 : i32
    %c0_i32_0 = arith.constant 0 : i32
    return %arg0, %c0_i32 : i32, i32
  }
  func.func @transform_1(%arg0: i32) -> (i32, i32) {
    %c0_i32 = arith.constant 0 : i32
    %c0_i32_0 = arith.constant 0 : i32
    return %arg0, %c0_i32 : i32, i32
  }
}

</mosaic_0001>

<llo_original>
// kernel: tpu_custom_call.1
$region0: #{tpu_custom_call.1}
  #allocation0 [shape = 'u32[]', space=smem, size = 0x4, offset = 0x4, fixed_abs, tag = 'smem constant byte address 0x4 - core index']
  #allocation1 [shape = 'u32[144,128]{1,0:T(1,128)}', space=vmem, size = 0x12000, scoped, tag = 'internal scratch']
  %s0 = inlined_call_operand.hbm [shape: f32[2,1024], index: 0, kind: input, shape index: {}, may-alias: {0,1}]
  %s1 = inlined_call_operand.hbm [shape: f32[2,1024], index: 1, kind: output, shape index: {}, may-alias: {0,1}]
  %s2 = sld [smem:[#allocation0]]
  $region18: #{tpu_custom_call.1} parent=0
    _
  %s4 = ssub.s32 1, %s2
  %s5 = scalar_select 0, %s4, %s2
  $region1: #{tpu_custom_call.1} parent=0
    #allocation2 [shape = 'u8[8192]{0}', space=vmem, size = 0x2000, scoped, tag = 'input window, operand 0, single buffered']
    #allocation3 [shape = 's32[1]{0}', space=sflag, size = 0x4, scoped, tag = 'scoped memory for tpu_custom_call.1']
    #allocation4 [shape = 's32[1]{0}', space=sflag, size = 0x4, scoped, tag = 'scoped memory for tpu_custom_call.1']
    #allocation5 [shape = 'u8[8192]{0}', space=vmem, size = 0x2000, scoped, tag = 'output window, operand 0, single buffered']
    %6 = vsyncpa [#allocation3], 0
    %7 = vsyncpa [#allocation4], 0
    // Predicated region
    $region2: #{tpu_custom_call.1} parent=1 // pred_check
      _
    $region3: #{tpu_custom_call.1} parent=1 // pred_check_branch
      %9 = sbr.rel (0) target = $region5
    $region4: #{tpu_custom_call.1} parent=1 // pred_region
      %s11 = ssub.s32 256, 256
      %12 = vsyncadd [#allocation3], %s11
      %s14 = sshll.u32 [#allocation2], 4
      %s15 = int_to_ptr.vmem [resolvable:$true] %s14
      %17 = dma.hbm_to_vmem [thread:$0]  %s0, 256, %s15, [#allocation3]
    $region5: #{tpu_custom_call.1} parent=1 // pred_fallthru
      _
    // Predicated region
    $region6: #{tpu_custom_call.1} parent=1 // pred_check
      _
    $region7: #{tpu_custom_call.1} parent=1 // pred_check_branch
      %19 = sbr.rel (0) target = $region9
    $region8: #{tpu_custom_call.1} parent=1 // pred_region
      %20 = dma.done [#allocation3], 256
    $region9: #{tpu_custom_call.1} parent=1 // pred_fallthru
      _
    %v21 = vld [vmem:[#allocation2] sm:$0xff]
    %v22 = vld [vmem:[#allocation2 + $0x8] sm:$0xff]
    %23 = vst [vmem:[#allocation5] sm:$0xff] %v21
    %24 = vst [vmem:[#allocation5 + $0x8] sm:$0xff] %v22
    // Predicated region
    $region10: #{tpu_custom_call.1} parent=1 // pred_check
      _
    $region11: #{tpu_custom_call.1} parent=1 // pred_check_branch
      %26 = sbr.rel (0) target = $region13
    $region12: #{tpu_custom_call.1} parent=1 // pred_region
      %s28 = ssub.s32 256, 256
      %29 = vsyncadd [#allocation4], %s28
      %s31 = sshll.u32 [#allocation5], 4
      %s32 = int_to_ptr.vmem [resolvable:$true] %s31
      %34 = dma.vmem_to_hbm [thread:$0]  %s32, 256, %s1, [#allocation4]
    $region13: #{tpu_custom_call.1} parent=1 // pred_fallthru
      _
    // Predicated region
    $region14: #{tpu_custom_call.1} parent=1 // pred_check
      _
    $region15: #{tpu_custom_call.1} parent=1 // pred_check_branch
      %36 = sbr.rel (0) target = $region17
    $region16: #{tpu_custom_call.1} parent=1 // pred_region
      %37 = dma.done [#allocation4], 256
    $region17: #{tpu_custom_call.1} parent=1 // pred_fallthru
      _
    %38 = vsyncpa [#allocation3], 1
    %39 = vsyncpa [#allocation4], 1

</llo_original>
